<compile_context>
chip_gen: v6e
topology: v6e:2x2x1
jax: 0.10.0
libtpu: 0.0.40
codegen_flags: <defaults>
</compile_context>

<pallas_src>
import jax
import jax.numpy as jnp
from jax.experimental import pallas as pl
from jax.experimental.pallas import tpu as pltpu


def _round_up(x, m):
    return (x + m - 1) // m * m


def _pick_row_tile(m, max_tile=1024):
    """Largest multiple of 8 that divides m and is <= max_tile (else m)."""
    hi = min(max_tile, m)
    hi -= hi % 8
    for cand in range(hi, 7, -8):
        if m % cand == 0:
            return cand
    return m


# ---------------- Pallas kernels ----------------

def _conv_s2d_kernel(x0_ref, x1_ref, w_ref, b_ref, o_ref):
    # x0_ref / x1_ref: (1, 1, Ws, 4*Cin) -- space-to-depth rows ho and ho+1
    # w_ref: (4, 4*Cin, CoutP) expanded weights for the shifts (dh, dw)
    # b_ref: (1, CoutP);  o_ref: (1, 1, Wo, CoutP)
    wo = o_ref.shape[2]
    acc = jnp.dot(x0_ref[0, 0, pl.ds(0, wo), :], w_ref[0],
                  preferred_element_type=jnp.float32)
    acc += jnp.dot(x0_ref[0, 0, pl.ds(1, wo), :], w_ref[1],
                   preferred_element_type=jnp.float32)
    acc += jnp.dot(x1_ref[0, 0, pl.ds(0, wo), :], w_ref[2],
                   preferred_element_type=jnp.float32)
    acc += jnp.dot(x1_ref[0, 0, pl.ds(1, wo), :], w_ref[3],
                   preferred_element_type=jnp.float32)
    o_ref[0, 0] = (acc + b_ref[...]).astype(o_ref.dtype)


def _avgpool_kernel(x_ref, p_ref, o_ref):
    # x_ref: (tr, 2*W) -- the two input rows feeding one output row, per tile
    # p_ref: (2*W, Wo) 0.25-valued selection matrix (fused 2x2 window average)
    o_ref[...] = jnp.dot(x_ref[...], p_ref[...],
                         preferred_element_type=jnp.float32).astype(o_ref.dtype)


# ---------------- Module ----------------

class Downsample:
    """JAX/Pallas port of the PyTorch Downsample module (NCHW interface)."""

    def __init__(self, in_channels, out_channels, with_conv, key):
        self.with_conv = with_conv
        if with_conv:
            kw, kb = jax.random.split(key)
            fan_in = in_channels * 3 * 3
            bound = 1.0 / (fan_in ** 0.5)
            # PyTorch Conv2d weight layout: (Cout, Cin, 3, 3)
            self.weight = jax.random.uniform(
                kw, (out_channels, in_channels, 3, 3), jnp.float32, -bound, bound)
            self.bias = jax.random.uniform(
                kb, (out_channels,), jnp.float32, -bound, bound)

    def __call__(self, x):  # x: NCHW
        return self._conv(x) if self.with_conv else self._pool(x)

    # ---- Conv2d(kernel=3, stride=2, padding=1), fused-im2col s2d matmul ----
    def _conv(self, x):
        N, Cin, H, W = x.shape
        Cout = self.weight.shape[0]
        Ho = (H - 1) // 2 + 1
        Wo = (W - 1) // 2 + 1
        Hs, Ws = Ho + 1, Wo + 1          # +1 halo row/col in s2d space
        Hp, Wp = 2 * Hs, 2 * Ws
        K4 = 4 * Cin
        CoutP = _round_up(Cout, 128)     # lane-dense output stores

        # One layout copy NCHW -> NHWC (see TODO at top of file).
        x_nhwc = jnp.transpose(x, (0, 2, 3, 1))
        xp = jnp.pad(x_nhwc, ((0, 0), (1, Hp - 1 - H), (1, Wp - 1 - W), (0, 0)))
        # Space-to-depth: (N, Hs, Ws, (ph, pw, ci)).  Turns the stride-2 conv
        # into 4 stride-1 shifted matmuls; no (M, 9*Cin) patches in HBM.
        xs = xp.reshape(N, Hs, 2, Ws, 2, Cin)
        xs = jnp.transpose(xs, (0, 1, 3, 2, 4, 5)).reshape(N, Hs, Ws, K4)

        # Expanded weights: shift s=(dh,dw) -> (4*Cin, CoutP), zero where the
        # sub-position (2dh+ph, 2dw+pw) falls outside the 3x3 window.
        w4 = jnp.pad(self.weight, ((0, 0), (0, 0), (0, 1), (0, 1)))  # (Cout,Cin,4,4)
        w6 = w4.reshape(Cout, Cin, 2, 2, 2, 2)                       # co,ci,dh,ph,dw,pw
        wexp = jnp.transpose(w6, (2, 4, 3, 5, 1, 0)).reshape(4, K4, Cout)
        wexp = jnp.pad(wexp, ((0, 0), (0, 0), (0, CoutP - Cout)))
        bexp = jnp.pad(self.bias, (0, CoutP - Cout)).reshape(1, CoutP)

        out = pl.pallas_call(
            _conv_s2d_kernel,
            out_shape=jax.ShapeDtypeStruct((N, Ho, Wo, CoutP), jnp.float32),
            grid_spec=pltpu.PrefetchScalarGridSpec(
                num_scalar_prefetch=0,
                grid=(N, Ho),
                in_specs=[
                    # s2d row ho and halo row ho+1 (Hs = Ho+1 keeps it in-bounds)
                    pl.BlockSpec((1, 1, Ws, K4), lambda n, h: (n, h, 0, 0)),
                    pl.BlockSpec((1, 1, Ws, K4), lambda n, h: (n, h + 1, 0, 0)),
                    # weights + bias stay VMEM-resident (constant block index)
                    pl.BlockSpec((4, K4, CoutP), lambda n, h: (0, 0, 0)),
                    pl.BlockSpec((1, CoutP), lambda n, h: (0, 0)),
                ],
                out_specs=pl.BlockSpec((1, 1, Wo, CoutP),
                                       lambda n, h: (n, h, 0, 0)),
            ),
            compiler_params=pltpu.CompilerParams(
                # both axes fully parallel -> megacore sharding on v7x
                dimension_semantics=("parallel", "parallel"),
                # sized to fit v7x's 64 MiB VMEM; plenty of headroom on v5e/v6e
                vmem_limit_bytes=64 * 1024 * 1024),
        )(xs, xs, wexp, bexp)

        if CoutP != Cout:
            out = out[..., :Cout]
        return jnp.transpose(out, (0, 3, 1, 2))  # back to NCHW

    # ---- AvgPool2d(2, stride=2), fused shifts, zero transposes ----
    def _pool(self, x):
        N, C, H, W = x.shape
        Ho, Wo = H // 2, W // 2
        if H != 2 * Ho or W != 2 * Wo:   # AvgPool2d floors odd trailing rows/cols
            x = x[:, :, :2 * Ho, :2 * Wo]
            H, W = 2 * Ho, 2 * Wo
        M = N * C * Ho
        # Pure reshape view of NCHW (no transpose, no extra copies): each row
        # holds the two input rows of one (n, c, ho) output row: [2ho | 2ho+1].
        xv = x.reshape(M, 2 * W)
        # Column j of the view feeds output column (j mod W) // 2, weight 0.25.
        src_col = (jnp.arange(2 * W) % W) // 2
        pmat = (src_col[:, None] == jnp.arange(Wo)[None, :]
                ).astype(jnp.float32) * 0.25

        tr = _pick_row_tile(M)           # 512-1024 rows at realistic sizes
        out = pl.pallas_call(
            _avgpool_kernel,
            out_shape=jax.ShapeDtypeStruct((M, Wo), jnp.float32),
            grid_spec=pltpu.PrefetchScalarGridSpec(
                num_scalar_prefetch=0,
                grid=(M // tr,),
                in_specs=[
                    pl.BlockSpec((tr, 2 * W), lambda i: (i, 0)),
                    pl.BlockSpec((2 * W, Wo), lambda i: (0, 0)),
                ],
                out_specs=pl.BlockSpec((tr, Wo), lambda i: (i, 0)),
            ),
            compiler_params=pltpu.CompilerParams(
                dimension_semantics=("parallel",),
                vmem_limit_bytes=64 * 1024 * 1024),
        )(xv, pmat)
        return out.reshape(N, C, Ho, Wo)


# ---------------- Demo / check ----------------

if __name__ == "__main__":
    key = jax.random.PRNGKey(0)
    kx, kp = jax.random.split(key)

    N, Cin, H, W = 2, 4, 16, 16
    Cout = 8
    x = jax.random.normal(kx, (N, Cin, H, W), jnp.float32)

    # --- with_conv=True path ---
    ds_conv = Downsample(Cin, Cout, with_conv=True, key=kp)
    conv_fn = jax.jit(ds_conv.__call__)
    y_conv = jax.block_until_ready(conv_fn(x))
    assert y_conv.shape == (N, Cout, H // 2, W // 2), y_conv.shape

    y_ref = jax.lax.conv_general_dilated(
        x, ds_conv.weight, window_strides=(2, 2),
        padding=((1, 1), (1, 1)),
        dimension_numbers=("NCHW", "OIHW", "NCHW"),
    ) + ds_conv.bias.reshape(1, Cout, 1, 1)
    conv_err = float(jnp.max(jnp.abs(y_conv - y_ref)))
    assert conv_err < 1e-4, conv_err

    # --- with_conv=False path ---
    ds_pool = Downsample(Cin, Cin, with_conv=False, key=kp)
    pool_fn = jax.jit(ds_pool.__call__)
    y_pool = jax.block_until_ready(pool_fn(x))
    assert y_pool.shape == (N, Cin, H // 2, W // 2), y_pool.shape

    y_pool_ref = x.reshape(N, Cin, H // 2, 2, W // 2, 2).mean(axis=(3, 5))
    pool_err = float(jnp.max(jnp.abs(y_pool - y_pool_ref)))
    assert pool_err < 1e-4, pool_err

    print("KERNEL_OK")
</pallas_src>

<mosaic_0001>
module attributes {stable_mosaic.version = 11 : i64} {
  func.func @_conv_s2d_kernel(%arg0: i32, %arg1: i32, %arg2: memref<1x1x9x16xf32, #tpu.memory_space<vmem>>, %arg3: memref<1x1x9x16xf32, #tpu.memory_space<vmem>>, %arg4: memref<4x16x128xf32, #tpu.memory_space<vmem>>, %arg5: memref<1x128xf32, #tpu.memory_space<vmem>>, %arg6: memref<1x1x8x128xf32, #tpu.memory_space<vmem>>) attributes {dimension_semantics = [#tpu.dimension_semantics<parallel>, #tpu.dimension_semantics<parallel>], iteration_bounds = array<i64: 2, 8>, scalar_prefetch = 0 : i64, scratch_operands = 0 : i64, tpu.core_type = #tpu.core_type<tc>, window_params = [{transform_indices = @transform_0, window_bounds = array<i64: 1, 1, 9, 16>}, {transform_indices = @transform_1, window_bounds = array<i64: 1, 1, 9, 16>}, {pipeline_mode = #tpu.pipeline_mode<synchronous>, transform_indices = @transform_2, window_bounds = array<i64: 4, 16, 128>}, {pipeline_mode = #tpu.pipeline_mode<synchronous>, transform_indices = @transform_3, window_bounds = array<i64: 1, 128>}, {transform_indices = @transform_4, window_bounds = array<i64: 1, 1, 8, 128>}]} {
    %c0 = arith.constant 0 : index
    %c0_0 = arith.constant 0 : index
    %c0_1 = arith.constant 0 : index
    %c0_2 = arith.constant 0 : index
    %0 = vector.load %arg2[%c0, %c0_0, %c0_1, %c0_2] : memref<1x1x9x16xf32, #tpu.memory_space<vmem>>, vector<1x1x8x16xf32>
    %1 = vector.shape_cast %0 : vector<1x1x8x16xf32> to vector<8x16xf32>
    %c0_3 = arith.constant 0 : index
    %c0_4 = arith.constant 0 : index
    %c0_5 = arith.constant 0 : index
    %2 = vector.load %arg4[%c0_3, %c0_4, %c0_5] : memref<4x16x128xf32, #tpu.memory_space<vmem>>, vector<1x16x128xf32>
    %3 = vector.shape_cast %2 : vector<1x16x128xf32> to vector<16x128xf32>
    %cst = arith.constant dense<0.000000e+00> : vector<8x128xf32>
    %4 = tpu.matmul %1, %3, %cst {dimension_numbers = #tpu.dot_dimension_numbers<[1], [0], [0], [1], [0, 0, 1, 1], [], []>} : vector<8x16xf32>, vector<16x128xf32>, vector<8x128xf32> -> vector<8x128xf32>
    %c0_6 = arith.constant 0 : index
    %c0_7 = arith.constant 0 : index
    %c1 = arith.constant 1 : index
    %c0_8 = arith.constant 0 : index
    %5 = vector.load %arg2[%c0_6, %c0_7, %c1, %c0_8] : memref<1x1x9x16xf32, #tpu.memory_space<vmem>>, vector<1x1x8x16xf32>
    %6 = vector.shape_cast %5 : vector<1x1x8x16xf32> to vector<8x16xf32>
    %c1_9 = arith.constant 1 : index
    %c0_10 = arith.constant 0 : index
    %c0_11 = arith.constant 0 : index
    %7 = vector.load %arg4[%c1_9, %c0_10, %c0_11] : memref<4x16x128xf32, #tpu.memory_space<vmem>>, vector<1x16x128xf32>
    %8 = vector.shape_cast %7 : vector<1x16x128xf32> to vector<16x128xf32>
    %cst_12 = arith.constant dense<0.000000e+00> : vector<8x128xf32>
    %9 = tpu.matmul %6, %8, %cst_12 {dimension_numbers = #tpu.dot_dimension_numbers<[1], [0], [0], [1], [0, 0, 1, 1], [], []>} : vector<8x16xf32>, vector<16x128xf32>, vector<8x128xf32> -> vector<8x128xf32>
    %10 = arith.addf %4, %9 : vector<8x128xf32>
    %c0_13 = arith.constant 0 : index
    %c0_14 = arith.constant 0 : index
    %c0_15 = arith.constant 0 : index
    %c0_16 = arith.constant 0 : index
    %11 = vector.load %arg3[%c0_13, %c0_14, %c0_15, %c0_16] : memref<1x1x9x16xf32, #tpu.memory_space<vmem>>, vector<1x1x8x16xf32>
    %12 = vector.shape_cast %11 : vector<1x1x8x16xf32> to vector<8x16xf32>
    %c2 = arith.constant 2 : index
    %c0_17 = arith.constant 0 : index
    %c0_18 = arith.constant 0 : index
    %13 = vector.load %arg4[%c2, %c0_17, %c0_18] : memref<4x16x128xf32, #tpu.memory_space<vmem>>, vector<1x16x128xf32>
    %14 = vector.shape_cast %13 : vector<1x16x128xf32> to vector<16x128xf32>
    %cst_19 = arith.constant dense<0.000000e+00> : vector<8x128xf32>
    %15 = tpu.matmul %12, %14, %cst_19 {dimension_numbers = #tpu.dot_dimension_numbers<[1], [0], [0], [1], [0, 0, 1, 1], [], []>} : vector<8x16xf32>, vector<16x128xf32>, vector<8x128xf32> -> vector<8x128xf32>
    %16 = arith.addf %10, %15 : vector<8x128xf32>
    %c0_20 = arith.constant 0 : index
    %c0_21 = arith.constant 0 : index
    %c1_22 = arith.constant 1 : index
    %c0_23 = arith.constant 0 : index
    %17 = vector.load %arg3[%c0_20, %c0_21, %c1_22, %c0_23] : memref<1x1x9x16xf32, #tpu.memory_space<vmem>>, vector<1x1x8x16xf32>
    %18 = vector.shape_cast %17 : vector<1x1x8x16xf32> to vector<8x16xf32>
    %c3 = arith.constant 3 : index
    %c0_24 = arith.constant 0 : index
    %c0_25 = arith.constant 0 : index
    %19 = vector.load %arg4[%c3, %c0_24, %c0_25] : memref<4x16x128xf32, #tpu.memory_space<vmem>>, vector<1x16x128xf32>
    %20 = vector.shape_cast %19 : vector<1x16x128xf32> to vector<16x128xf32>
    %cst_26 = arith.constant dense<0.000000e+00> : vector<8x128xf32>
    %21 = tpu.matmul %18, %20, %cst_26 {dimension_numbers = #tpu.dot_dimension_numbers<[1], [0], [0], [1], [0, 0, 1, 1], [], []>} : vector<8x16xf32>, vector<16x128xf32>, vector<8x128xf32> -> vector<8x128xf32>
    %22 = arith.addf %16, %21 : vector<8x128xf32>
    %c0_27 = arith.constant 0 : index
    %c0_28 = arith.constant 0 : index
    %23 = vector.load %arg5[%c0_27, %c0_28] : memref<1x128xf32, #tpu.memory_space<vmem>>, vector<1x128xf32>
    %24 = vector.broadcast %23 : vector<1x128xf32> to vector<8x128xf32>
    %25 = arith.addf %22, %24 : vector<8x128xf32>
    %c0_29 = arith.constant 0 : index
    %c0_30 = arith.constant 0 : index
    %c0_31 = arith.constant 0 : index
    %c0_32 = arith.constant 0 : index
    %26 = vector.load %arg6[%c0_29, %c0_30, %c0_31, %c0_32] : memref<1x1x8x128xf32, #tpu.memory_space<vmem>>, vector<1x1x8x128xf32>
    %27 = vector.shape_cast %26 : vector<1x1x8x128xf32> to vector<8x128xf32>
    %28 = vector.shape_cast %25 : vector<8x128xf32> to vector<1x1x8x128xf32>
    tpu.vector_store %arg6[%c0_29, %c0_30, %c0_31, %c0_32], %28 {strides = array<i32>} : memref<1x1x8x128xf32, #tpu.memory_space<vmem>>, vector<1x1x8x128xf32>,
    return
  }
  func.func @transform_0(%arg0: i32, %arg1: i32) -> (i32, i32, i32, i32) {
    %c0_i32 = arith.constant 0 : i32
    %c0_i32_0 = arith.constant 0 : i32
    %c0_i32_1 = arith.constant 0 : i32
    return %arg0, %arg1, %c0_i32, %c0_i32_0 : i32, i32, i32, i32
  }
  func.func @transform_1(%arg0: i32, %arg1: i32) -> (i32, i32, i32, i32) {
    %c1_i32 = arith.constant 1 : i32
    %0 = arith.addi %arg1, %c1_i32 : i32
    %c0_i32 = arith.constant 0 : i32
    %c0_i32_0 = arith.constant 0 : i32
    %c0_i32_1 = arith.constant 0 : i32
    return %arg0, %0, %c0_i32, %c0_i32_0 : i32, i32, i32, i32
  }
  func.func @transform_2(%arg0: i32, %arg1: i32) -> (i32, i32, i32) {
    %c0_i32 = arith.constant 0 : i32
    %c0_i32_0 = arith.constant 0 : i32
    %c0_i32_1 = arith.constant 0 : i32
    %c0_i32_2 = arith.constant 0 : i32
    return %c0_i32, %c0_i32_0, %c0_i32_1 : i32, i32, i32
  }
  func.func @transform_3(%arg0: i32, %arg1: i32) -> (i32, i32) {
    %c0_i32 = arith.constant 0 : i32
    %c0_i32_0 = arith.constant 0 : i32
    %c0_i32_1 = arith.constant 0 : i32
    return %c0_i32, %c0_i32_0 : i32, i32
  }
  func.func @transform_4(%arg0: i32, %arg1: i32) -> (i32, i32, i32, i32) {
    %c0_i32 = arith.constant 0 : i32
    %c0_i32_0 = arith.constant 0 : i32
    %c0_i32_1 = arith.constant 0 : i32
    return %arg0, %arg1, %c0_i32, %c0_i32_0 : i32, i32, i32, i32
  }
}

</mosaic_0001>

<llo_original>
// kernel: a_call__.1
$region0: #{a_call__.1}
  #allocation0 [shape = 'u32[]', space=smem, size = 0x4, offset = 0x4, fixed_abs, tag = 'smem constant byte address 0x4 - core index']
  #allocation1 [shape = 'u32[144,128]{1,0:T(1,128)}', space=vmem, size = 0x12000, scoped, tag = 'internal scratch']
  %s0 = inlined_call_operand.vmem [shape: f32[2,9,9,16], index: 0, kind: input, shape index: {}, may-alias: {0,1}]
  %s1 = inlined_call_operand.vmem [shape: f32[2,9,9,16], index: 1, kind: input, shape index: {}, may-alias: {0,1}]
  %s2 = inlined_call_operand.vmem [shape: f32[4,16,128], index: 2, kind: input, shape index: {}]
  %s3 = inlined_call_operand.vmem [shape: f32[1,128], index: 3, kind: input, shape index: {}]
  %s4 = inlined_call_operand.vmem [shape: f32[2,8,8,128], index: 4, kind: output, shape index: {}]
  %s5 = sld [smem:[#allocation0]]
  $region49: #{a_call__.1} parent=0
    _
  %s7 = ssub.s32 1, %s5
  %s8 = scalar_select 0, %s7, %s5
  loop: start=0, step=1, limit=18
  $region2: #{a_call__.1} parent=0 // loop_pre_header
    _
  $region3: #{a_call__.1} parent=0 // loop_header
    %s10 = sphi 0, %s14
    %p11 = scmp.ge.s32.totalorder %s10, 18
    %s17 = sphi 0, %s29
    %s18 = sphi 0, %s25
    %s19 = sphi 0, %s17
    %s20 = sphi 0, %s18
    %s21 = sphi 0, %s19
    %s22 = sphi 0, %s20
    %s34 = sphi 0, %s36
    %s37 = sphi 0, %s34
    %s38 = sphi 0, %s37
    %s54 = sphi 0, %s38
    %s64 = sphi 0, %s66
    %s67 = sphi 0, %s64
    %s68 = sphi 0, %s67
    %s84 = sphi 0, %s68
    %s88 = sphi 0, %s88
    %s90 = sphi 0, %s88
    %s91 = sphi 0, %s90
    %s105 = sphi 0, %s91
    %s109 = sphi 0, %s109
    %s111 = sphi 0, %s109
    %s112 = sphi 0, %s111
    %s126 = sphi 0, %s112
    %s134 = sphi 0, %s136
    %s137 = sphi 0, %s134
    %s138 = sphi 0, %s137
    %s154 = sphi 0, %s138
  $region4: #{a_call__.1} parent=0 // loop_header_branch
    %13 = sbr.rel (%p11) target = $region8
  $region5: #{a_call__.1} parent=0 // loop_body
    %s15 = ssub.s32 %s10, 1
    %s16 = ssub.s32 %s10, 2
    %s23 = sadd.s32 1, %s18
    %p24 = scmp.ge.s32.totalorder %s23, 8
    %s25 = scalar_select %p24, 0, %s23
    %s26 = sadd.s32 1, %s17
    %s27 = scalar_select %p24, %s26, %s17
    %p28 = scmp.ge.s32.totalorder %s27, 2
    %s29 = scalar_select %p28, 0, %s27
    %s30 = ssub.s32 %s17, %s29
    %s31 = ssub.s32 %s18, %s25
    %s32 = sor.u32 %s30, %s31
    %p33 = scmp.eq.s32.totalorder %s32, 0
    %s35 = sadd.s32 %s34, 1
    %s36 = scalar_select %p33, %s34, %s35
    %p39 = pneg %p33
    %p40 = scmp.eq.s32.totalorder %s10, 15
    %p41 = por %p39, %p40
    %p42 = scmp.ne.s32.totalorder %s34, %s37
    %p43 = scmp.eq.s32.totalorder %s10, 0
    %p44 = por %p42, %p43
    %p45 = scmp.ne.s32.totalorder %s34, %s37
    %p46 = scmp.eq.s32.totalorder %s15, 15
    %p47 = por %p45, %p46
    %p48 = scmp.ne.s32.totalorder %s37, %s38
    %p49 = scmp.eq.s32.totalorder %s15, 0
    %p50 = por %p48, %p49
    %p51 = scmp.ne.s32.totalorder %s37, %s38
    %p52 = scmp.eq.s32.totalorder %s16, 15
    %p53 = por %p51, %p52
    %p55 = scmp.ne.s32.totalorder %s38, %s54
    %p56 = scmp.eq.s32.totalorder %s16, 0
    %p57 = por %p55, %p56
    %s58 = sadd.s32 %s18, 1
    %s59 = sadd.s32 %s25, 1
    %s60 = ssub.s32 %s17, %s29
    %s61 = ssub.s32 %s58, %s59
    %s62 = sor.u32 %s60, %s61
    %p63 = scmp.eq.s32.totalorder %s62, 0
    %s65 = sadd.s32 %s64, 1
    %s66 = scalar_select %p63, %s64, %s65
    %p69 = pneg %p63
    %p70 = scmp.eq.s32.totalorder %s10, 15
    %p71 = por %p69, %p70
    %p72 = scmp.ne.s32.totalorder %s64, %s67
    %p73 = scmp.eq.s32.totalorder %s10, 0
    %p74 = por %p72, %p73
    %p75 = scmp.ne.s32.totalorder %s64, %s67
    %p76 = scmp.eq.s32.totalorder %s15, 15
    %p77 = por %p75, %p76
    %p78 = scmp.ne.s32.totalorder %s67, %s68
    %p79 = scmp.eq.s32.totalorder %s15, 0
    %p80 = por %p78, %p79
    %p81 = scmp.ne.s32.totalorder %s67, %s68
    %p82 = scmp.eq.s32.totalorder %s16, 15
    %p83 = por %p81, %p82
    %p85 = scmp.ne.s32.totalorder %s68, %s84
    %p86 = scmp.eq.s32.totalorder %s16, 0
    %p87 = por %p85, %p86
    %s89 = sadd.s32 %s88, 1
    %p92 = scmp.eq.s32.totalorder %s10, 15
    %p93 = scmp.ne.s32.totalorder %s88, %s90
    %p94 = scmp.eq.s32.totalorder %s10, 0
    %p95 = por %p93, %p94
    %p96 = scmp.ne.s32.totalorder %s88, %s90
    %p97 = scmp.eq.s32.totalorder %s15, 15
    %p98 = por %p96, %p97
    %p99 = scmp.ne.s32.totalorder %s90, %s91
    %p100 = scmp.eq.s32.totalorder %s15, 0
    %p101 = por %p99, %p100
    %p102 = scmp.ne.s32.totalorder %s90, %s91
    %p103 = scmp.eq.s32.totalorder %s16, 15
    %p104 = por %p102, %p103
    %p106 = scmp.ne.s32.totalorder %s91, %s105
    %p107 = scmp.eq.s32.totalorder %s16, 0
    %p108 = por %p106, %p107
    %s110 = sadd.s32 %s109, 1
    %p113 = scmp.eq.s32.totalorder %s10, 15
    %p114 = scmp.ne.s32.totalorder %s109, %s111
    %p115 = scmp.eq.s32.totalorder %s10, 0
    %p116 = por %p114, %p115
    %p117 = scmp.ne.s32.totalorder %s109, %s111
    %p118 = scmp.eq.s32.totalorder %s15, 15
    %p119 = por %p117, %p118
    %p120 = scmp.ne.s32.totalorder %s111, %s112
    %p121 = scmp.eq.s32.totalorder %s15, 0
    %p122 = por %p120, %p121
    %p123 = scmp.ne.s32.totalorder %s111, %s112
    %p124 = scmp.eq.s32.totalorder %s16, 15
    %p125 = por %p123, %p124
    %p127 = scmp.ne.s32.totalorder %s112, %s126
    %p128 = scmp.eq.s32.totalorder %s16, 0
    %p129 = por %p127, %p128
    %s130 = ssub.s32 %s17, %s29
    %s131 = ssub.s32 %s18, %s25
    %s132 = sor.u32 %s130, %s131
    %p133 = scmp.eq.s32.totalorder %s132, 0
    %s135 = sadd.s32 %s134, 1
    %s136 = scalar_select %p133, %s134, %s135
    %p139 = pneg %p133
    %p140 = scmp.eq.s32.totalorder %s10, 15
    %p141 = por %p139, %p140
    %p142 = scmp.ne.s32.totalorder %s134, %s137
    %p143 = scmp.eq.s32.totalorder %s10, 0
    %p144 = por %p142, %p143
    %p145 = scmp.ne.s32.totalorder %s134, %s137
    %p146 = scmp.eq.s32.totalorder %s15, 15
    %p147 = por %p145, %p146
    %p148 = scmp.ne.s32.totalorder %s137, %s138
    %p149 = scmp.eq.s32.totalorder %s15, 0
    %p150 = por %p148, %p149
    %p151 = scmp.ne.s32.totalorder %s137, %s138
    %p152 = scmp.eq.s32.totalorder %s16, 15
    %p153 = por %p151, %p152
    %p155 = scmp.ne.s32.totalorder %s138, %s154
    %p156 = scmp.eq.s32.totalorder %s16, 0
    %p157 = por %p155, %p156
    %p158 = scmp.le.s32.totalorder 1, %s10
    %p159 = scmp.lt.s32.totalorder %s10, 17
    %p160 = pnand %p158, %p159
    %p161 = pneg %p160
    // Predicated region
    $region9: #{a_call__.1} parent=5 // pred_check
      _
    $region10: #{a_call__.1} parent=5 // pred_check_branch
      %163 = sbr.rel (%p160) target = $region12
    $region11: #{a_call__.1} parent=5 // pred_region
      %s164 = ssub.s32 %s10, 1
      // Predicated region
      $region13: #{a_call__.1} parent=11 // pred_check
        %p165 = pneg %p101
      $region14: #{a_call__.1} parent=11 // pred_check_branch
        %167 = sbr.rel (%p165) target = $region16
      $region15: #{a_call__.1} parent=11 // pred_region
        _
      $region16: #{a_call__.1} parent=11 // pred_fallthru
        _
      // Predicated region
      $region17: #{a_call__.1} parent=11 // pred_check
        %p168 = pneg %p122
      $region18: #{a_call__.1} parent=11 // pred_check_branch
        %170 = sbr.rel (%p168) target = $region20
      $region19: #{a_call__.1} parent=11 // pred_region
        _
      $region20: #{a_call__.1} parent=11 // pred_fallthru
        _
    $region12: #{a_call__.1} parent=5 // pred_fallthru
      _
    %p171 = scmp.lt.s32.totalorder %s10, 16
    // Predicated region
    $region21: #{a_call__.1} parent=5 // pred_check
      %p172 = pneg %p171
    $region22: #{a_call__.1} parent=5 // pred_check_branch
      %174 = sbr.rel (%p172) target = $region24
    $region23: #{a_call__.1} parent=5 // pred_region
      // Predicated region
      $region25: #{a_call__.1} parent=23 // pred_check
        %p175 = pneg %p44
      $region26: #{a_call__.1} parent=23 // pred_check_branch
        %177 = sbr.rel (%p175) target = $region28
      $region27: #{a_call__.1} parent=23 // pred_region
        %p178 = scmp.lt.s32.totalorder %s17, 1
        %s179 = scalar_select %p178, %s17, 1
        %p180 = scmp.lt.s32.totalorder %s18, 8
        %s181 = scalar_select %p180, %s18, 8
        %s182 = smul.addr %s181, 2
        %s183 = smul.addr %s179, 18
        %s184 = sadd.s32 %s182, %s183
        %s185 = smul.addr %s184, 8
        %s186 = scalar_lea.vmem %s0, %s185
      $region28: #{a_call__.1} parent=23 // pred_fallthru
        _
      // Predicated region
      $region29: #{a_call__.1} parent=23 // pred_check
        %p187 = pneg %p74
      $region30: #{a_call__.1} parent=23 // pred_check_branch
        %189 = sbr.rel (%p187) target = $region32
      $region31: #{a_call__.1} parent=23 // pred_region
        %s190 = sadd.s32 %s18, 1
        %p191 = scmp.lt.s32.totalorder %s17, 1
        %s192 = scalar_select %p191, %s17, 1
        %p193 = scmp.lt.s32.totalorder %s190, 8
        %s194 = scalar_select %p193, %s190, 8
        %s195 = smul.addr %s194, 2
        %s196 = smul.addr %s192, 18
        %s197 = sadd.s32 %s195, %s196
        %s198 = smul.addr %s197, 8
        %s199 = scalar_lea.vmem %s1, %s198
        %s200 = sadd.s32 %s18, 1
      $region32: #{a_call__.1} parent=23 // pred_fallthru
        _
    $region24: #{a_call__.1} parent=5 // pred_fallthru
      _
    %p201 = scmp.le.s32.totalorder 1, %s10
    %p202 = scmp.lt.s32.totalorder %s10, 17
    %p203 = pnand %p201, %p202
    %p204 = pneg %p203
    // Predicated region
    $region33: #{a_call__.1} parent=5 // pred_check
      _
    $region34: #{a_call__.1} parent=5 // pred_check_branch
      %206 = sbr.rel (%p203) target = $region36
    $region35: #{a_call__.1} parent=5 // pred_region
      %s207 = ssub.s32 %s10, 1
      %p208 = scmp.lt.s32.totalorder %s19, 1
      %s209 = scalar_select %p208, %s19, 1
      %p210 = scmp.lt.s32.totalorder %s20, 8
      %s211 = scalar_select %p210, %s20, 8
      %s212 = smul.addr %s211, 2
      %s213 = smul.addr %s209, 18
      %s214 = sadd.s32 %s212, %s213
      %s215 = smul.addr %s214, 8
      %s216 = scalar_lea.vmem %s0, %s215
      %p217 = pneg %p50
      %p218 = pneg %p47
      %s219 = sadd.s32 %s20, 1
      %p220 = scmp.lt.s32.totalorder %s19, 1
      %s221 = scalar_select %p220, %s19, 1
      %p222 = scmp.lt.s32.totalorder %s219, 8
      %s223 = scalar_select %p222, %s219, 8
      %s224 = smul.addr %s223, 2
      %s225 = smul.addr %s221, 18
      %s226 = sadd.s32 %s224, %s225
      %s227 = smul.addr %s226, 8
      %s228 = scalar_lea.vmem %s1, %s227
      %p229 = pneg %p80
      %p230 = pneg %p77
      %p231 = pneg %p101
      %p232 = pneg %p98
      %p233 = pneg %p122
      %p234 = pneg %p119
      %p235 = pneg %p150
      %p236 = pneg %p147
      %p237 = scmp.lt.s32.totalorder %s19, 1
      %s238 = scalar_select %p237, %s19, 1
      %p239 = scmp.lt.s32.totalorder %s20, 7
      %s240 = scalar_select %p239, %s20, 7
      %s241 = smul.addr %s238, 8
      %s242 = sadd.s32 %s240, %s241
      %s243 = smul.addr %s242, 8
      %s244 = scalar_lea.vmem %s4, %s243
      %p245 = scmp.lt.s32.totalorder %s19, 1
      %s246 = scalar_select %p245, %s19, 1
      %p247 = scmp.lt.s32.totalorder %s20, 8
      %s248 = scalar_select %p247, %s20, 8
      %s249 = smul.addr %s248, 2
      %s250 = smul.addr %s246, 18
      %s251 = sadd.s32 %s249, %s250
      %s252 = smul.addr %s251, 8
      %s253 = scalar_lea.vmem %s0, %s252
      %s254 = sadd.s32 %s20, 1
      %p255 = scmp.lt.s32.totalorder %s19, 1
      %s256 = scalar_select %p255, %s19, 1
      %p257 = scmp.lt.s32.totalorder %s254, 8
      %s258 = scalar_select %p257, %s254, 8
      %s259 = smul.addr %s258, 2
      %s260 = smul.addr %s256, 18
      %s261 = sadd.s32 %s259, %s260
      %s262 = smul.addr %s261, 8
      %s263 = scalar_lea.vmem %s1, %s262
      %s264 = sadd.s32 %s20, 1
      %p265 = scmp.lt.s32.totalorder %s19, 1
      %s266 = scalar_select %p265, %s19, 1
      %p267 = scmp.lt.s32.totalorder %s20, 7
      %s268 = scalar_select %p267, %s20, 7
      %s269 = smul.addr %s266, 8
      %s270 = sadd.s32 %s268, %s269
      %s271 = smul.addr %s270, 8
      %s272 = scalar_lea.vmem %s4, %s271
      %v273 = vld [vmem:[%s253] sm:$0xff]
      %v274 = vld [vmem:[%s2] sm:$0xff]
      %v275 = vld [vmem:[%s2 + $0x8] sm:$0xff]
      %v276 = vld [vmem:[%s253 + $0x1] sm:$0xff]
      %s277 = scalar_lea.vmem %s2, 16
      %v278 = vld [vmem:[%s277] sm:$0xff]
      %v279 = vld [vmem:[%s277 + $0x8] sm:$0xff]
      %vm280 = vcmask 130048
      %v282 = vsel %vm280, %v276, 0
      %284 = vmatprep.subr.mxu0 0.0
      %285 = vmatpush1.msra.mxu0 0.0
      %286 = vmatprep.subr.mxu0 0.0
      %287 = vmatpush1.msra.mxu0 0.0
      %288 = vmatprep.subr.mxu0 0.0
      %289 = vmatpush1.msra.mxu0 0.0
      %290 = vmatprep.subr.mxu0 0.0
      %291 = vmatpush1.msra.mxu0 0.0
      %292 = vmatprep.subr.mxu0 0.0
      %293 = vmatpush1.msra.mxu0 0.0
      %294 = vmatprep.subr.mxu0 0.0
      %295 = vmatpush1.msra.mxu0 0.0
      %296 = vmatprep.subr.mxu0 0.0
      %297 = vmatpush1.msra.mxu0 0.0
      %298 = vmatprep.subr.mxu0 0.0
      %299 = vmatpush1.msra.mxu0 0.0
      %300 = vmatprep.subr.mxu0 0.0
      %301 = vmatpush1.msra.mxu0 0.0
      %302 = vmatprep.subr.mxu0 0.0
      %303 = vmatpush1.msra.mxu0 0.0
      %304 = vmatprep.subr.mxu0 0.0
      %305 = vmatpush1.msra.mxu0 0.0
      %306 = vmatprep.subr.mxu0 0.0
      %307 = vmatpush1.msra.mxu0 0.0
      %308 = vmatprep.subr.mxu0 0.0
      %309 = vmatpush1.msra.mxu0 0.0
      %310 = vmatprep.subr.mxu0 0.0
      %311 = vmatpush1.msra.mxu0 0.0
      %312 = vmatprep.subr.mxu0 0.0
      %313 = vmatpush1.msra.mxu0 %v279
      %314 = vmatprep.subr.mxu0 0.0
      %315 = vmatpush1.msra.mxu0 %v278
      %316 = vmatprep.subr.mxu0 0.0
      %317 = vmatpush2.msra.mxu0 0.0
      %318 = vmatprep.subr.mxu0 0.0
      %319 = vmatpush2.msra.mxu0 0.0
      %320 = vmatprep.subr.mxu0 0.0
      %321 = vmatpush2.msra.mxu0 0.0
      %322 = vmatprep.subr.mxu0 0.0
      %323 = vmatpush2.msra.mxu0 0.0
      %324 = vmatprep.subr.mxu0 0.0
      %325 = vmatpush2.msra.mxu0 0.0
      %326 = vmatprep.subr.mxu0 0.0
      %327 = vmatpush2.msra.mxu0 0.0
      %328 = vmatprep.subr.mxu0 0.0
      %329 = vmatpush2.msra.mxu0 0.0
      %330 = vmatprep.subr.mxu0 0.0
      %331 = vmatpush2.msra.mxu0 0.0
      %332 = vmatprep.subr.mxu0 0.0
      %333 = vmatpush2.msra.mxu0 0.0
      %334 = vmatprep.subr.mxu0 0.0
      %335 = vmatpush2.msra.mxu0 0.0
      %336 = vmatprep.subr.mxu0 0.0
      %337 = vmatpush2.msra.mxu0 0.0
      %338 = vmatprep.subr.mxu0 0.0
      %339 = vmatpush2.msra.mxu0 0.0
      %340 = vmatprep.subr.mxu0 0.0
      %341 = vmatpush2.msra.mxu0 0.0
      %342 = vmatprep.subr.mxu0 0.0
      %343 = vmatpush2.msra.mxu0 0.0
      %344 = vmatprep.subr.mxu0 0.0
      %345 = vmatpush2.msra.mxu0 0.0
      %346 = vmatprep.subr.mxu0 0.0
      %347 = vmatpush2.msra.mxu0 0.0
      %348 = vmatprep.mubr.f32.mxu0 0.0
      %349 = vmatmul.mubr.f32.gmra.mxu0 %v282
      %v350 = vpop.f32.mrf.mxu0
      %v351 = vadd.f32 0.0, %v350
      %v352 = vpop.f32.mrf.mxu0
      %353 = vdwg.mxu0
      %v355 = vsel %vm280, %v273, 0
      %357 = vmatprep.subr.mxu0 0.0
      %358 = vmatpush1.msra.mxu0 0.0
      %359 = vmatprep.subr.mxu0 0.0
      %360 = vmatpush1.msra.mxu0 0.0
      %361 = vmatprep.subr.mxu0 0.0
      %362 = vmatpush1.msra.mxu0 0.0
      %363 = vmatprep.subr.mxu0 0.0
      %364 = vmatpush1.msra.mxu0 0.0
      %365 = vmatprep.subr.mxu0 0.0
      %366 = vmatpush1.msra.mxu0 0.0
      %367 = vmatprep.subr.mxu0 0.0
      %368 = vmatpush1.msra.mxu0 0.0
      %369 = vmatprep.subr.mxu0 0.0
      %370 = vmatpush1.msra.mxu0 0.0
      %371 = vmatprep.subr.mxu0 0.0
      %372 = vmatpush1.msra.mxu0 0.0
      %373 = vmatprep.subr.mxu0 0.0
      %374 = vmatpush1.msra.mxu0 0.0
      %375 = vmatprep.subr.mxu0 0.0
      %376 = vmatpush1.msra.mxu0 0.0
      %377 = vmatprep.subr.mxu0 0.0
      %378 = vmatpush1.msra.mxu0 0.0
      %379 = vmatprep.subr.mxu0 0.0
      %380 = vmatpush1.msra.mxu0 0.0
      %381 = vmatprep.subr.mxu0 0.0
      %382 = vmatpush1.msra.mxu0 0.0
      %383 = vmatprep.subr.mxu0 0.0
      %384 = vmatpush1.msra.mxu0 0.0
      %385 = vmatprep.subr.mxu0 0.0
      %386 = vmatpush1.msra.mxu0 %v275
      %387 = vmatprep.subr.mxu0 0.0
      %388 = vmatpush1.msra.mxu0 %v274
      %389 = vmatprep.subr.mxu0 0.0
      %390 = vmatpush2.msra.mxu0 0.0
      %391 = vmatprep.subr.mxu0 0.0
      %392 = vmatpush2.msra.mxu0 0.0
      %393 = vmatprep.subr.mxu0 0.0
      %394 = vmatpush2.msra.mxu0 0.0
      %395 = vmatprep.subr.mxu0 0.0
      %396 = vmatpush2.msra.mxu0 0.0
      %397 = vmatprep.subr.mxu0 0.0
      %398 = vmatpush2.msra.mxu0 0.0
      %399 = vmatprep.subr.mxu0 0.0
      %400 = vmatpush2.msra.mxu0 0.0
      %401 = vmatprep.subr.mxu0 0.0
      %402 = vmatpush2.msra.mxu0 0.0
      %403 = vmatprep.subr.mxu0 0.0
      %404 = vmatpush2.msra.mxu0 0.0
      %405 = vmatprep.subr.mxu0 0.0
      %406 = vmatpush2.msra.mxu0 0.0
      %407 = vmatprep.subr.mxu0 0.0
      %408 = vmatpush2.msra.mxu0 0.0
      %409 = vmatprep.subr.mxu0 0.0
      %410 = vmatpush2.msra.mxu0 0.0
      %411 = vmatprep.subr.mxu0 0.0
      %412 = vmatpush2.msra.mxu0 0.0
      %413 = vmatprep.subr.mxu0 0.0
      %414 = vmatpush2.msra.mxu0 0.0
      %415 = vmatprep.subr.mxu0 0.0
      %416 = vmatpush2.msra.mxu0 0.0
      %417 = vmatprep.subr.mxu0 0.0
      %418 = vmatpush2.msra.mxu0 0.0
      %419 = vmatprep.subr.mxu0 0.0
      %420 = vmatpush2.msra.mxu0 0.0
      %421 = vmatprep.mubr.f32.mxu0 0.0
      %422 = vmatmul.mubr.f32.gmra.mxu0 %v355
      %v423 = vpop.f32.mrf.mxu0
      %v424 = vadd.f32 %v351, %v423
      %v425 = vpop.f32.mrf.mxu0
      %426 = vdwg.mxu0
      %v427 = vld [vmem:[%s263] sm:$0xff]
      %s428 = scalar_lea.vmem %s2, 32
      %v429 = vld [vmem:[%s428] sm:$0xff]
      %v430 = vld [vmem:[%s428 + $0x8] sm:$0xff]
      %v432 = vsel %vm280, %v427, 0
      %434 = vmatprep.subr.mxu0 0.0
      %435 = vmatpush1.msra.mxu0 0.0
      %436 = vmatprep.subr.mxu0 0.0
      %437 = vmatpush1.msra.mxu0 0.0
      %438 = vmatprep.subr.mxu0 0.0
      %439 = vmatpush1.msra.mxu0 0.0
      %440 = vmatprep.subr.mxu0 0.0
      %441 = vmatpush1.msra.mxu0 0.0
      %442 = vmatprep.subr.mxu0 0.0
      %443 = vmatpush1.msra.mxu0 0.0
      %444 = vmatprep.subr.mxu0 0.0
      %445 = vmatpush1.msra.mxu0 0.0
      %446 = vmatprep.subr.mxu0 0.0
      %447 = vmatpush1.msra.mxu0 0.0
      %448 = vmatprep.subr.mxu0 0.0
      %449 = vmatpush1.msra.mxu0 0.0
      %450 = vmatprep.subr.mxu0 0.0
      %451 = vmatpush1.msra.mxu0 0.0
      %452 = vmatprep.subr.mxu0 0.0
      %453 = vmatpush1.msra.mxu0 0.0
      %454 = vmatprep.subr.mxu0 0.0
      %455 = vmatpush1.msra.mxu0 0.0
      %456 = vmatprep.subr.mxu0 0.0
      %457 = vmatpush1.msra.mxu0 0.0
      %458 = vmatprep.subr.mxu0 0.0
      %459 = vmatpush1.msra.mxu0 0.0
      %460 = vmatprep.subr.mxu0 0.0
      %461 = vmatpush1.msra.mxu0 0.0
      %462 = vmatprep.subr.mxu0 0.0
      %463 = vmatpush1.msra.mxu0 %v430
      %464 = vmatprep.subr.mxu0 0.0
      %465 = vmatpush1.msra.mxu0 %v429
      %466 = vmatprep.subr.mxu0 0.0
      %467 = vmatpush2.msra.mxu0 0.0
      %468 = vmatprep.subr.mxu0 0.0
      %469 = vmatpush2.msra.mxu0 0.0
      %470 = vmatprep.subr.mxu0 0.0
      %471 = vmatpush2.msra.mxu0 0.0
      %472 = vmatprep.subr.mxu0 0.0
      %473 = vmatpush2.msra.mxu0 0.0
      %474 = vmatprep.subr.mxu0 0.0
      %475 = vmatpush2.msra.mxu0 0.0
      %476 = vmatprep.subr.mxu0 0.0
      %477 = vmatpush2.msra.mxu0 0.0
      %478 = vmatprep.subr.mxu0 0.0
      %479 = vmatpush2.msra.mxu0 0.0
      %480 = vmatprep.subr.mxu0 0.0
      %481 = vmatpush2.msra.mxu0 0.0
      %482 = vmatprep.subr.mxu0 0.0
      %483 = vmatpush2.msra.mxu0 0.0
      %484 = vmatprep.subr.mxu0 0.0
      %485 = vmatpush2.msra.mxu0 0.0
      %486 = vmatprep.subr.mxu0 0.0
      %487 = vmatpush2.msra.mxu0 0.0
      %488 = vmatprep.subr.mxu0 0.0
      %489 = vmatpush2.msra.mxu0 0.0
      %490 = vmatprep.subr.mxu0 0.0
      %491 = vmatpush2.msra.mxu0 0.0
      %492 = vmatprep.subr.mxu0 0.0
      %493 = vmatpush2.msra.mxu0 0.0
      %494 = vmatprep.subr.mxu0 0.0
      %495 = vmatpush2.msra.mxu0 0.0
      %496 = vmatprep.subr.mxu0 0.0
      %497 = vmatpush2.msra.mxu0 0.0
      %498 = vmatprep.mubr.f32.mxu0 0.0
      %499 = vmatmul.mubr.f32.gmra.mxu0 %v432
      %v500 = vpop.f32.mrf.mxu0
      %v501 = vadd.f32 0.0, %v500
      %v502 = vpop.f32.mrf.mxu0
      %503 = vdwg.mxu0
      %v504 = vadd.f32 %v424, %v501
      %v505 = vld [vmem:[%s263 + $0x1] sm:$0xff]
      %s506 = scalar_lea.vmem %s2, 48
      %v507 = vld [vmem:[%s506] sm:$0xff]
      %v508 = vld [vmem:[%s506 + $0x8] sm:$0xff]
      %v510 = vsel %vm280, %v505, 0
      %512 = vmatprep.subr.mxu0 0.0
      %513 = vmatpush1.msra.mxu0 0.0
      %514 = vmatprep.subr.mxu0 0.0
      %515 = vmatpush1.msra.mxu0 0.0
      %516 = vmatprep.subr.mxu0 0.0
      %517 = vmatpush1.msra.mxu0 0.0
      %518 = vmatprep.subr.mxu0 0.0
      %519 = vmatpush1.msra.mxu0 0.0
      %520 = vmatprep.subr.mxu0 0.0
      %521 = vmatpush1.msra.mxu0 0.0
      %522 = vmatprep.subr.mxu0 0.0
      %523 = vmatpush1.msra.mxu0 0.0
      %524 = vmatprep.subr.mxu0 0.0
      %525 = vmatpush1.msra.mxu0 0.0
      %526 = vmatprep.subr.mxu0 0.0
      %527 = vmatpush1.msra.mxu0 0.0
      %528 = vmatprep.subr.mxu0 0.0
      %529 = vmatpush1.msra.mxu0 0.0
      %530 = vmatprep.subr.mxu0 0.0
      %531 = vmatpush1.msra.mxu0 0.0
      %532 = vmatprep.subr.mxu0 0.0
      %533 = vmatpush1.msra.mxu0 0.0
      %534 = vmatprep.subr.mxu0 0.0
      %535 = vmatpush1.msra.mxu0 0.0
      %536 = vmatprep.subr.mxu0 0.0
      %537 = vmatpush1.msra.mxu0 0.0
      %538 = vmatprep.subr.mxu0 0.0
      %539 = vmatpush1.msra.mxu0 0.0
      %540 = vmatprep.subr.mxu0 0.0
      %541 = vmatpush1.msra.mxu0 %v508
      %542 = vmatprep.subr.mxu0 0.0
      %543 = vmatpush1.msra.mxu0 %v507
      %544 = vmatprep.subr.mxu0 0.0
      %545 = vmatpush2.msra.mxu0 0.0
      %546 = vmatprep.subr.mxu0 0.0
      %547 = vmatpush2.msra.mxu0 0.0
      %548 = vmatprep.subr.mxu0 0.0
      %549 = vmatpush2.msra.mxu0 0.0
      %550 = vmatprep.subr.mxu0 0.0
      %551 = vmatpush2.msra.mxu0 0.0
      %552 = vmatprep.subr.mxu0 0.0
      %553 = vmatpush2.msra.mxu0 0.0
      %554 = vmatprep.subr.mxu0 0.0
      %555 = vmatpush2.msra.mxu0 0.0
      %556 = vmatprep.subr.mxu0 0.0
      %557 = vmatpush2.msra.mxu0 0.0
      %558 = vmatprep.subr.mxu0 0.0
      %559 = vmatpush2.msra.mxu0 0.0
      %560 = vmatprep.subr.mxu0 0.0
      %561 = vmatpush2.msra.mxu0 0.0
      %562 = vmatprep.subr.mxu0 0.0
      %563 = vmatpush2.msra.mxu0 0.0
      %564 = vmatprep.subr.mxu0 0.0
      %565 = vmatpush2.msra.mxu0 0.0
      %566 = vmatprep.subr.mxu0 0.0
      %567 = vmatpush2.msra.mxu0 0.0
      %568 = vmatprep.subr.mxu0 0.0
      %569 = vmatpush2.msra.mxu0 0.0
      %570 = vmatprep.subr.mxu0 0.0
      %571 = vmatpush2.msra.mxu0 0.0
      %572 = vmatprep.subr.mxu0 0.0
      %573 = vmatpush2.msra.mxu0 0.0
      %574 = vmatprep.subr.mxu0 0.0
      %575 = vmatpush2.msra.mxu0 0.0
      %576 = vmatprep.mubr.f32.mxu0 0.0
      %577 = vmatmul.mubr.f32.gmra.mxu0 %v510
      %v578 = vpop.f32.mrf.mxu0
      %v579 = vadd.f32 0.0, %v578
      %v580 = vpop.f32.mrf.mxu0
      %581 = vdwg.mxu0
      %v582 = vadd.f32 %v504, %v579
      %v583 = vld [vmem:[%s3] sm:$0x1]
      %v585 = vlaneseq
      %v586 = vshrl.u32 %v585, 7
      %v587 = vsub.s32 0, %v586
      %v588 = vrot.slane %v583, %v587
      %v590 = vadd.f32 %v582, %v588
      %591 = vst [vmem:[%s272] sm:$0xff] %v590
      %p592 = scmp.lt.s32.totalorder %s19, 1
      %s593 = scalar_select %p592, %s19, 1
      %p594 = scmp.lt.s32.totalorder %s20, 7
      %s595 = scalar_select %p594, %s20, 7
      %s596 = smul.addr %s593, 8
      %s597 = sadd.s32 %s595, %s596
      %s598 = smul.addr %s597, 8
      %s599 = scalar_lea.vmem %s4, %s598
      // Predicated region
      $region37: #{a_call__.1} parent=35 // pred_check
        %p600 = pneg %p147
      $region38: #{a_call__.1} parent=35 // pred_check_branch
        %602 = sbr.rel (%p600) target = $region40
      $region39: #{a_call__.1} parent=35 // pred_region
        _
      $region40: #{a_call__.1} parent=35 // pred_fallthru
        _
    $region36: #{a_call__.1} parent=5 // pred_fallthru
      _
    %p603 = scmp.le.s32.totalorder 2, %s10
    // Predicated region
    $region41: #{a_call__.1} parent=5 // pred_check
      %p604 = pneg %p603
    $region42: #{a_call__.1} parent=5 // pred_check_branch
      %606 = sbr.rel (%p604) target = $region44
    $region43: #{a_call__.1} parent=5 // pred_region
      %s607 = ssub.s32 %s10, 2
      // Predicated region
      $region45: #{a_call__.1} parent=43 // pred_check
        %p608 = pneg %p153
      $region46: #{a_call__.1} parent=43 // pred_check_branch
        %610 = sbr.rel (%p608) target = $region48
      $region47: #{a_call__.1} parent=43 // pred_region
        %p611 = scmp.lt.s32.totalorder %s21, 1
        %s612 = scalar_select %p611, %s21, 1
        %p613 = scmp.lt.s32.totalorder %s22, 7
        %s614 = scalar_select %p613, %s22, 7
        %s615 = smul.addr %s612, 8
        %s616 = sadd.s32 %s614, %s615
        %s617 = smul.addr %s616, 8
        %s618 = scalar_lea.vmem %s4, %s617
      $region48: #{a_call__.1} parent=43 // pred_fallthru
        _
    $region44: #{a_call__.1} parent=5 // pred_fallthru
      _
  $region6: #{a_call__.1} parent=0 // loop_footer
    %s14 = sadd.s32 1, %s10
  $region7: #{a_call__.1} parent=0 // loop_footer_branch
    %9 = sbr.rel target = $region3
  $region8: #{a_call__.1} parent=0 // loop_exit
    _

</llo_original>
